<compile_context>
chip_gen: v7x
topology: tpu7x:2x2x1
jax: 0.10.0
libtpu: 0.0.40
codegen_flags: <defaults>
</compile_context>

<pallas_src>
import jax
import jax.numpy as jnp
from jax import lax
from jax.experimental import pallas as pl
from jax.experimental.pallas import tpu as pltpu


def _cdiv(a, b):
    return -(-a // b)


def _rup(v, m):
    return ((v + m - 1) // m) * m


def _head_kernel(w_ref, b_ref, x_ref, o_ref):
    # w_ref: (patch_len, d_model)            b_ref: (patch_len, 1), f32
    # x_ref: (tile_bc, d_model, num_patch)   o_ref: (tile_bc, patch_len, num_patch)
    tile_bc = x_ref.shape[0]
    patch_len, d_model = w_ref.shape
    # Hoisted once per grid step (no per-row rebroadcast of weight or bias).
    wb = jnp.broadcast_to(w_ref[...], (tile_bc, patch_len, d_model))
    # Single batched contraction over d_model; tile_bc is the batch dim.
    # num_patch stays on the lane axis for both the X read and the O store and
    # the output comes out directly in (tile_bc, patch_len, num_patch) layout,
    # so no transpose/relayout is needed before the store.
    acc = lax.dot_general(
        wb, x_ref[...],
        dimension_numbers=(((2,), (1,)), ((0,), (0,))),
        preferred_element_type=jnp.float32)
    o_ref[...] = (acc + b_ref[...]).astype(o_ref.dtype)


def _tpu_caps():
    """Generation-aware VMEM budgets / per-step HBM-traffic targets."""
    vmem_cap = 64 << 20  # conservative default (v7x per-TensorCore VMEM)
    try:
        info = pltpu.get_tpu_info()
        vmem_cap = int(getattr(info, "vmem_capacity_bytes", vmem_cap))
    except Exception:
        pass  # keep the conservative default
    if vmem_cap <= (64 << 20):
        # v7x-like: 64 MiB VMEM per TC, 2 TCs sharing HBM -> tight budget, even grid.
        return dict(two_cores=True, vmem_budget=40 << 20,
                    vmem_limit=48 << 20, target_bytes=8 << 20)
    # v5e / v6e: 128 MiB VMEM, single TensorCore -> grow blocks toward roofline.
    return dict(two_cores=False, vmem_budget=80 << 20,
                vmem_limit=96 << 20, target_bytes=12 << 20)


def _pick_tile_bc(bc, d_model, num_patch, patch_len, x_itemsize, out_itemsize,
                  *, target_bytes, vmem_budget, two_cores, max_tile_bc=512):
    """Rows of (d_model, num_patch) slabs processed per grid step.

    All footprints use real VMEM tile sizes: last dim padded to 128 lanes,
    second-minor dim padded to the dtype sublane multiple (8 f32 / 16 bf16).
    """
    lane_np = _rup(num_patch, 128)
    lane_dm = _rup(d_model, 128)
    sub_x = 8 * max(1, 4 // int(x_itemsize))
    sub_o = 8 * max(1, 4 // int(out_itemsize))

    per_row_x = _rup(d_model, sub_x) * lane_np * x_itemsize        # pipelined in
    per_row_o = _rup(patch_len, sub_o) * lane_np * out_itemsize    # pipelined out
    per_row_pipe = per_row_x + per_row_o
    per_row_acc = _rup(patch_len, 8) * lane_np * 4                 # f32 accumulator
    per_row_wb = _rup(patch_len, sub_x) * lane_dm * x_itemsize     # broadcast W copy
    per_row_all = 2 * per_row_pipe + per_row_acc + per_row_wb      # 2x = double buffer

    # Resident weight + bias blocks (double-buffered, padded), independent of t.
    fixed = 2 * (_rup(patch_len, sub_x) * lane_dm * x_itemsize
                 + _rup(patch_len, 8) * 128 * 4)

    # Target several MiB of HBM traffic per step (amortizes ~0.35 us/step).
    t = max(1, int(target_bytes) // max(per_row_pipe, 1))
    # Fit the double-buffered working set inside the VMEM budget.
    max_t = max(1, (int(vmem_budget) - fixed) // max(per_row_all, 1))
    # max_tile_bc only guards batch-unroll code size / accumulator footprint for
    # pathologically small rows; it never binds below the 8-16 MiB/step regime.
    t = min(t, max_t, bc, max_tile_bc)

    if two_cores and bc >= 2:
        # >= 2 grid steps so ("parallel",) shards across both TensorCores, and an
        # even step count so neither core idles on a tail step.
        t = min(t, (bc + 1) // 2)
        steps = _cdiv(bc, t)
        if steps % 2 == 1 and steps < bc:
            t = _cdiv(bc, steps + 1)
    return int(max(t, 1))


def patchtst_linear_head(x, weight, bias, *, tile_bc=None):
    """x: [bs, nvars, d_model, num_patch] -> [bs, nvars, patch_len, num_patch]

    weight: [patch_len, d_model] (PyTorch nn.Linear convention), bias: [patch_len].
    Dropout is eval-mode (identity).
    # TODO(synk): train-mode dropout would need pltpu.prng_seed/prng_random_bits
    # inside the kernel; the eval-mode forward (identity) is reproduced exactly.
    """
    bs, nvars, d_model, num_patch = x.shape
    patch_len = weight.shape[0]
    bc = bs * nvars

    # Free reshapes only -- no HBM transposes.
    x3d = x.reshape(bc, d_model, num_patch)
    w = weight.astype(x.dtype)                              # bf16-friendly operands
    b2d = bias.astype(jnp.float32).reshape(patch_len, 1)    # added post-acc in f32

    caps = _tpu_caps()
    x_item = jnp.dtype(x.dtype).itemsize
    if tile_bc is None:
        tile_bc = _pick_tile_bc(bc, d_model, num_patch, patch_len, x_item, x_item,
                                target_bytes=caps["target_bytes"],
                                vmem_budget=caps["vmem_budget"],
                                two_cores=caps["two_cores"])
    grid = (_cdiv(bc, tile_bc),)

    flops = 2 * bc * patch_len * d_model * num_patch
    bytes_accessed = int(x3d.size) * x_item + int(w.size) * x_item \
        + int(b2d.size) * 4 + bc * patch_len * num_patch * x_item

    out3d = pl.pallas_call(
        _head_kernel,
        out_shape=jax.ShapeDtypeStruct((bc, patch_len, num_patch), x.dtype),
        grid_spec=pltpu.PrefetchScalarGridSpec(
            num_scalar_prefetch=0,
            grid=grid,
            in_specs=[
                # Weight & bias: tiny, resident across the grid (constant index_map).
                pl.BlockSpec((patch_len, d_model), lambda i: (0, 0)),
                pl.BlockSpec((patch_len, 1), lambda i: (0, 0)),
                # X chunk: [tile_bc, d_model, num_patch]; num_patch on lanes.
                pl.BlockSpec((tile_bc, d_model, num_patch), lambda i: (i, 0, 0)),
            ],
            out_specs=pl.BlockSpec((tile_bc, patch_len, num_patch),
                                   lambda i: (i, 0, 0)),
        ),
        compiler_params=pltpu.CompilerParams(
            dimension_semantics=("parallel",),
            vmem_limit_bytes=caps["vmem_limit"],
        ),
        cost_estimate=pl.CostEstimate(
            flops=flops, transcendentals=0, bytes_accessed=bytes_accessed),
    )(w, b2d, x3d)

    # TODO(synk): for deployments with num_patch < 128, packing several bc rows
    # onto the lane axis (one W @ (d_model, k*num_patch) matmul per pop) would
    # make output stores fully lane-dense at the price of two in-kernel
    # relayouts; kept transpose-free here since the kernel is HBM-bound.
    return out3d.reshape(bs, nvars, patch_len, num_patch)


def _reference(x, weight, bias):
    # Pure-JAX reference mirroring the PyTorch forward (eval-mode dropout):
    # permute -> linear -> permute back, written without the permutes.
    return jnp.einsum('bcdp,kd->bckp', x, weight) + bias[None, None, :, None]


if __name__ == "__main__":
    # Small, module-consistent shapes.
    bs, nvars, d_model, num_patch, patch_len = 2, 4, 32, 8, 16

    key = jax.random.PRNGKey(0)
    kx, kw, kb = jax.random.split(key, 3)

    x = jax.random.normal(kx, (bs, nvars, d_model, num_patch), dtype=jnp.float32)

    # Deterministic nn.Linear-style init: U(-1/sqrt(d_model), 1/sqrt(d_model)).
    bound = 1.0 / (d_model ** 0.5)
    weight = jax.random.uniform(kw, (patch_len, d_model), dtype=jnp.float32,
                                minval=-bound, maxval=bound)
    bias = jax.random.uniform(kb, (patch_len,), dtype=jnp.float32,
                              minval=-bound, maxval=bound)

    out = patchtst_linear_head(x, weight, bias)
    out = jax.block_until_ready(out)

    ref = _reference(x, weight, bias)
    assert out.shape == (bs, nvars, patch_len, num_patch), out.shape
    assert jnp.allclose(out, ref, atol=1e-5, rtol=1e-5), "mismatch vs reference"

    print("KERNEL_OK")
</pallas_src>

<mosaic_0001>
module attributes {stable_mosaic.version = 11 : i64} {
  func.func @_head_kernel(%arg0: i32, %arg1: memref<16x32xf32, #tpu.memory_space<vmem>>, %arg2: memref<16x1xf32, #tpu.memory_space<vmem>>, %arg3: memref<4x32x8xf32, #tpu.memory_space<vmem>>, %arg4: memref<4x16x8xf32, #tpu.memory_space<vmem>>) attributes {dimension_semantics = [#tpu.dimension_semantics<parallel>], iteration_bounds = array<i64: 2>, scalar_prefetch = 0 : i64, scratch_operands = 0 : i64, tpu.core_type = #tpu.core_type<tc>, window_params = [{pipeline_mode = #tpu.pipeline_mode<synchronous>, transform_indices = @transform_0, window_bounds = array<i64: 16, 32>}, {pipeline_mode = #tpu.pipeline_mode<synchronous>, transform_indices = @transform_1, window_bounds = array<i64: 16, 1>}, {transform_indices = @transform_2, window_bounds = array<i64: 4, 32, 8>}, {transform_indices = @transform_3, window_bounds = array<i64: 4, 16, 8>}]} {
    %c0 = arith.constant 0 : index
    %c0_0 = arith.constant 0 : index
    %0 = vector.load %arg1[%c0, %c0_0] : memref<16x32xf32, #tpu.memory_space<vmem>>, vector<16x32xf32>
    %1 = vector.shape_cast %0 : vector<16x32xf32> to vector<1x16x32xf32>
    %2 = vector.broadcast %1 : vector<1x16x32xf32> to vector<4x16x32xf32>
    %c0_1 = arith.constant 0 : index
    %c0_2 = arith.constant 0 : index
    %c0_3 = arith.constant 0 : index
    %3 = vector.load %arg3[%c0_1, %c0_2, %c0_3] : memref<4x32x8xf32, #tpu.memory_space<vmem>>, vector<4x32x8xf32>
    %cst = arith.constant dense<0.000000e+00> : vector<4x16x8xf32>
    %4 = tpu.matmul %2, %3, %cst {dimension_numbers = #tpu.dot_dimension_numbers<[2], [1], [1], [2], [0, 0, 0, 1, 1, 2], [0], [0]>} : vector<4x16x32xf32>, vector<4x32x8xf32>, vector<4x16x8xf32> -> vector<4x16x8xf32>
    %c0_4 = arith.constant 0 : index
    %c0_5 = arith.constant 0 : index
    %5 = vector.load %arg2[%c0_4, %c0_5] : memref<16x1xf32, #tpu.memory_space<vmem>>, vector<16x1xf32>
    %6 = vector.shape_cast %5 : vector<16x1xf32> to vector<1x16x1xf32>
    %7 = vector.broadcast %6 : vector<1x16x1xf32> to vector<4x16x8xf32>
    %8 = arith.addf %4, %7 : vector<4x16x8xf32>
    %c0_6 = arith.constant 0 : index
    %c0_7 = arith.constant 0 : index
    %c0_8 = arith.constant 0 : index
    %9 = vector.load %arg4[%c0_6, %c0_7, %c0_8] : memref<4x16x8xf32, #tpu.memory_space<vmem>>, vector<4x16x8xf32>
    tpu.vector_store %arg4[%c0_6, %c0_7, %c0_8], %8 {strides = array<i32>} : memref<4x16x8xf32, #tpu.memory_space<vmem>>, vector<4x16x8xf32>,
    return
  }
  func.func @transform_0(%arg0: i32) -> (i32, i32) {
    %c0_i32 = arith.constant 0 : i32
    %c0_i32_0 = arith.constant 0 : i32
    %c0_i32_1 = arith.constant 0 : i32
    return %c0_i32, %c0_i32_0 : i32, i32
  }
  func.func @transform_1(%arg0: i32) -> (i32, i32) {
    %c0_i32 = arith.constant 0 : i32
    %c0_i32_0 = arith.constant 0 : i32
    %c0_i32_1 = arith.constant 0 : i32
    return %c0_i32, %c0_i32_0 : i32, i32
  }
  func.func @transform_2(%arg0: i32) -> (i32, i32, i32) {
    %c0_i32 = arith.constant 0 : i32
    %c0_i32_0 = arith.constant 0 : i32
    %c0_i32_1 = arith.constant 0 : i32
    return %arg0, %c0_i32, %c0_i32_0 : i32, i32, i32
  }
  func.func @transform_3(%arg0: i32) -> (i32, i32, i32) {
    %c0_i32 = arith.constant 0 : i32
    %c0_i32_0 = arith.constant 0 : i32
    %c0_i32_1 = arith.constant 0 : i32
    return %arg0, %c0_i32, %c0_i32_0 : i32, i32, i32
  }
}

</mosaic_0001>

<llo_original>
// kernel: tpu_custom_call.1
$region0: #{tpu_custom_call.1}
  #allocation0 [shape = 'u32[]', space=smem, size = 0x4, offset = 0x4, fixed_abs, tag = 'smem constant byte address 0x4 - core index']
  #allocation1 [shape = 'u32[144,128]{1,0:T(1,128)}', space=vmem, size = 0x12000, scoped, tag = 'internal scratch']
  %s0 = inlined_call_operand.vmem [shape: f32[16,32], index: 0, kind: input, shape index: {}]
  %s1 = inlined_call_operand.vmem [shape: f32[16,1], index: 1, kind: input, shape index: {}]
  %s2 = inlined_call_operand.vmem [shape: f32[8,32,8], index: 2, kind: input, shape index: {}]
  %s3 = inlined_call_operand.vmem [shape: f32[8,16,8], index: 3, kind: output, shape index: {}]
  %s4 = sld [smem:[#allocation0]]
  $region45: #{tpu_custom_call.1} parent=0
    _
  %s6 = ssub.s32 1, %s4
  %s7 = scalar_select 0, %s6, %s4
  loop: start=0, step=1, limit=4
  $region2: #{tpu_custom_call.1} parent=0 // loop_pre_header
    _
  $region3: #{tpu_custom_call.1} parent=0 // loop_header
    %s9 = sphi 0, %s13
    %p10 = scmp.ge.s32.totalorder %s9, 4
    %s17 = sphi 0, %s17
    %s19 = sphi 0, %s17
    %s20 = sphi 0, %s19
    %s34 = sphi 0, %s20
    %s38 = sphi 0, %s38
    %s40 = sphi 0, %s38
    %s41 = sphi 0, %s40
    %s55 = sphi 0, %s41
    %s61 = sphi 0, %s63
    %s64 = sphi 0, %s61
    %s65 = sphi 0, %s64
    %s81 = sphi 0, %s65
    %s87 = sphi 0, %s89
    %s90 = sphi 0, %s87
    %s91 = sphi 0, %s90
    %s107 = sphi 0, %s91
  $region4: #{tpu_custom_call.1} parent=0 // loop_header_branch
    %12 = sbr.rel (%p10) target = $region8
  $region5: #{tpu_custom_call.1} parent=0 // loop_body
    %s14 = ssub.s32 %s9, 1
    %s15 = ssub.s32 %s9, 2
    %s16 = sadd.s32 %s9, 1
    %s18 = sadd.s32 %s17, 1
    %p21 = scmp.eq.s32.totalorder %s9, 1
    %p22 = scmp.ne.s32.totalorder %s17, %s19
    %p23 = scmp.eq.s32.totalorder %s9, 0
    %p24 = por %p22, %p23
    %p25 = scmp.ne.s32.totalorder %s17, %s19
    %p26 = scmp.eq.s32.totalorder %s14, 1
    %p27 = por %p25, %p26
    %p28 = scmp.ne.s32.totalorder %s19, %s20
    %p29 = scmp.eq.s32.totalorder %s14, 0
    %p30 = por %p28, %p29
    %p31 = scmp.ne.s32.totalorder %s19, %s20
    %p32 = scmp.eq.s32.totalorder %s15, 1
    %p33 = por %p31, %p32
    %p35 = scmp.ne.s32.totalorder %s20, %s34
    %p36 = scmp.eq.s32.totalorder %s15, 0
    %p37 = por %p35, %p36
    %s39 = sadd.s32 %s38, 1
    %p42 = scmp.eq.s32.totalorder %s9, 1
    %p43 = scmp.ne.s32.totalorder %s38, %s40
    %p44 = scmp.eq.s32.totalorder %s9, 0
    %p45 = por %p43, %p44
    %p46 = scmp.ne.s32.totalorder %s38, %s40
    %p47 = scmp.eq.s32.totalorder %s14, 1
    %p48 = por %p46, %p47
    %p49 = scmp.ne.s32.totalorder %s40, %s41
    %p50 = scmp.eq.s32.totalorder %s14, 0
    %p51 = por %p49, %p50
    %p52 = scmp.ne.s32.totalorder %s40, %s41
    %p53 = scmp.eq.s32.totalorder %s15, 1
    %p54 = por %p52, %p53
    %p56 = scmp.ne.s32.totalorder %s41, %s55
    %p57 = scmp.eq.s32.totalorder %s15, 0
    %p58 = por %p56, %p57
    %s59 = ssub.s32 %s9, %s16
    %p60 = scmp.eq.s32.totalorder %s59, 0
    %s62 = sadd.s32 %s61, 1
    %s63 = scalar_select %p60, %s61, %s62
    %p66 = pneg %p60
    %p67 = scmp.eq.s32.totalorder %s9, 1
    %p68 = por %p66, %p67
    %p69 = scmp.ne.s32.totalorder %s61, %s64
    %p70 = scmp.eq.s32.totalorder %s9, 0
    %p71 = por %p69, %p70
    %p72 = scmp.ne.s32.totalorder %s61, %s64
    %p73 = scmp.eq.s32.totalorder %s14, 1
    %p74 = por %p72, %p73
    %p75 = scmp.ne.s32.totalorder %s64, %s65
    %p76 = scmp.eq.s32.totalorder %s14, 0
    %p77 = por %p75, %p76
    %p78 = scmp.ne.s32.totalorder %s64, %s65
    %p79 = scmp.eq.s32.totalorder %s15, 1
    %p80 = por %p78, %p79
    %p82 = scmp.ne.s32.totalorder %s65, %s81
    %p83 = scmp.eq.s32.totalorder %s15, 0
    %p84 = por %p82, %p83
    %s85 = ssub.s32 %s9, %s16
    %p86 = scmp.eq.s32.totalorder %s85, 0
    %s88 = sadd.s32 %s87, 1
    %s89 = scalar_select %p86, %s87, %s88
    %p92 = pneg %p86
    %p93 = scmp.eq.s32.totalorder %s9, 1
    %p94 = por %p92, %p93
    %p95 = scmp.ne.s32.totalorder %s87, %s90
    %p96 = scmp.eq.s32.totalorder %s9, 0
    %p97 = por %p95, %p96
    %p98 = scmp.ne.s32.totalorder %s87, %s90
    %p99 = scmp.eq.s32.totalorder %s14, 1
    %p100 = por %p98, %p99
    %p101 = scmp.ne.s32.totalorder %s90, %s91
    %p102 = scmp.eq.s32.totalorder %s14, 0
    %p103 = por %p101, %p102
    %p104 = scmp.ne.s32.totalorder %s90, %s91
    %p105 = scmp.eq.s32.totalorder %s15, 1
    %p106 = por %p104, %p105
    %p108 = scmp.ne.s32.totalorder %s91, %s107
    %p109 = scmp.eq.s32.totalorder %s15, 0
    %p110 = por %p108, %p109
    %p111 = scmp.le.s32.totalorder 1, %s9
    %p112 = scmp.lt.s32.totalorder %s9, 3
    %p113 = pnand %p111, %p112
    %p114 = pneg %p113
    // Predicated region
    $region9: #{tpu_custom_call.1} parent=5 // pred_check
      _
    $region10: #{tpu_custom_call.1} parent=5 // pred_check_branch
      %116 = sbr.rel (%p113) target = $region12
    $region11: #{tpu_custom_call.1} parent=5 // pred_region
      %s117 = ssub.s32 %s9, 1
      // Predicated region
      $region13: #{tpu_custom_call.1} parent=11 // pred_check
        %p118 = pneg %p30
      $region14: #{tpu_custom_call.1} parent=11 // pred_check_branch
        %120 = sbr.rel (%p118) target = $region16
      $region15: #{tpu_custom_call.1} parent=11 // pred_region
        _
      $region16: #{tpu_custom_call.1} parent=11 // pred_fallthru
        _
      // Predicated region
      $region17: #{tpu_custom_call.1} parent=11 // pred_check
        %p121 = pneg %p51
      $region18: #{tpu_custom_call.1} parent=11 // pred_check_branch
        %123 = sbr.rel (%p121) target = $region20
      $region19: #{tpu_custom_call.1} parent=11 // pred_region
        _
      $region20: #{tpu_custom_call.1} parent=11 // pred_fallthru
        _
    $region12: #{tpu_custom_call.1} parent=5 // pred_fallthru
      _
    %p124 = scmp.lt.s32.totalorder %s9, 2
    // Predicated region
    $region21: #{tpu_custom_call.1} parent=5 // pred_check
      %p125 = pneg %p124
    $region22: #{tpu_custom_call.1} parent=5 // pred_check_branch
      %127 = sbr.rel (%p125) target = $region24
    $region23: #{tpu_custom_call.1} parent=5 // pred_region
      // Predicated region
      $region25: #{tpu_custom_call.1} parent=23 // pred_check
        %p128 = pneg %p71
      $region26: #{tpu_custom_call.1} parent=23 // pred_check_branch
        %130 = sbr.rel (%p128) target = $region28
      $region27: #{tpu_custom_call.1} parent=23 // pred_region
        %s131 = smul.u32 4, %s9
        %p132 = scmp.lt.s32.totalorder %s131, 7
        %s133 = scalar_select %p132, %s131, 7
        %s134 = smul.addr %s133, 4
        %s135 = smul.addr %s134, 8
        %s136 = scalar_lea.vmem %s2, %s135
        %s137 = smul.u32 4, %s9
      $region28: #{tpu_custom_call.1} parent=23 // pred_fallthru
        _
    $region24: #{tpu_custom_call.1} parent=5 // pred_fallthru
      _
    %p138 = scmp.le.s32.totalorder 1, %s9
    %p139 = scmp.lt.s32.totalorder %s9, 3
    %p140 = pnand %p138, %p139
    %p141 = pneg %p140
    // Predicated region
    $region29: #{tpu_custom_call.1} parent=5 // pred_check
      _
    $region30: #{tpu_custom_call.1} parent=5 // pred_check_branch
      %143 = sbr.rel (%p140) target = $region32
    $region31: #{tpu_custom_call.1} parent=5 // pred_region
      %s144 = ssub.s32 %s9, 1
      %p145 = pneg %p30
      %p146 = pneg %p27
      %p147 = pneg %p51
      %p148 = pneg %p48
      %s149 = smul.u32 4, %s14
      %p150 = scmp.lt.s32.totalorder %s149, 7
      %s151 = scalar_select %p150, %s149, 7
      %s152 = smul.addr %s151, 4
      %s153 = smul.addr %s152, 8
      %s154 = scalar_lea.vmem %s2, %s153
      %p155 = pneg %p77
      %p156 = pneg %p74
      %p157 = pneg %p103
      %p158 = pneg %p100
      %s159 = smul.u32 4, %s14
      %p160 = scmp.lt.s32.totalorder %s159, 7
      %s161 = scalar_select %p160, %s159, 7
      %s162 = smul.addr %s161, 2
      %s163 = smul.addr %s162, 8
      %s164 = scalar_lea.vmem %s3, %s163
      %s165 = smul.u32 4, %s14
      %p166 = scmp.lt.s32.totalorder %s165, 7
      %s167 = scalar_select %p166, %s165, 7
      %s168 = smul.addr %s167, 4
      %s169 = smul.addr %s168, 8
      %s170 = scalar_lea.vmem %s2, %s169
      %s171 = smul.u32 4, %s14
      %s172 = smul.u32 4, %s14
      %p173 = scmp.lt.s32.totalorder %s172, 7
      %s174 = scalar_select %p173, %s172, 7
      %s175 = smul.addr %s174, 2
      %s176 = smul.addr %s175, 8
      %s177 = scalar_lea.vmem %s3, %s176
      %s178 = smul.u32 4, %s14
      %v179 = vld [vmem:[%s0] sm:$0xff]
      %v180 = vld [vmem:[%s0 + $0x8] sm:$0xff]
      %v181 = vld [vmem:[%s170] sm:$0xff]
      %v182 = vld [vmem:[%s170 + $0x8] sm:$0xff]
      %v183 = vld [vmem:[%s170 + $0x10] sm:$0xff]
      %v184 = vld [vmem:[%s170 + $0x18] sm:$0xff]
      %v185 = vld [vmem:[%s170 + $0x20] sm:$0xff]
      %v186 = vld [vmem:[%s170 + $0x28] sm:$0xff]
      %v187 = vld [vmem:[%s170 + $0x30] sm:$0xff]
      %v188 = vld [vmem:[%s170 + $0x38] sm:$0xff]
      %v189 = vld [vmem:[%s170 + $0x40] sm:$0xff]
      %v190 = vld [vmem:[%s170 + $0x48] sm:$0xff]
      %v191 = vld [vmem:[%s170 + $0x50] sm:$0xff]
      %v192 = vld [vmem:[%s170 + $0x58] sm:$0xff]
      %v193 = vld [vmem:[%s170 + $0x60] sm:$0xff]
      %v194 = vld [vmem:[%s170 + $0x68] sm:$0xff]
      %v195 = vld [vmem:[%s170 + $0x70] sm:$0xff]
      %v196 = vld [vmem:[%s170 + $0x78] sm:$0xff]
      %v197 = vld [vmem:[%s1] sm:$0xff]
      %v198 = vld [vmem:[%s1 + $0x8] sm:$0xff]
      %200 = vset.pattern.permute.xlu0 0
      %201 = vperm.xlu0 %200, %v197
      %v202 = vpop.permute.xlu0 %201
      %205 = vset.pattern.permute.xlu0 0
      %206 = vperm.xlu0 %205, %v198
      %v207 = vpop.permute.xlu0 %206
      %vm209 = vcmask 261120
      %v211 = vsel %vm209, %v179, 0
      %v214 = vsel %vm209, %v180, 0
      %216 = vmatprep.subr.mxu0 0.0
      %217 = vmatpush1.msra.mxu0 %v181
      %218 = vmatprep.subr.mxu0 0.0
      %219 = vmatpush1.msra.mxu0 %v182
      %220 = vmatprep.subr.mxu0 0.0
      %221 = vmatpush1.msra.mxu0 %v183
      %222 = vmatprep.subr.mxu0 0.0
      %223 = vmatpush1.msra.mxu0 %v184
      %224 = vmatprep.subr.mxu0 0.0
      %225 = vmatpush1.msra.mxu0 0.0
      %226 = vmatprep.subr.mxu0 0.0
      %227 = vmatpush1.msra.mxu0 0.0
      %228 = vmatprep.subr.mxu0 0.0
      %229 = vmatpush1.msra.mxu0 0.0
      %230 = vmatprep.subr.mxu0 0.0
      %231 = vmatpush1.msra.mxu0 0.0
      %232 = vmatprep.subr.mxu0 0.0
      %233 = vmatpush1.msra.mxu0 0.0
      %234 = vmatprep.subr.mxu0 0.0
      %235 = vmatpush1.msra.mxu0 0.0
      %236 = vmatprep.subr.mxu0 0.0
      %237 = vmatpush1.msra.mxu0 0.0
      %238 = vmatprep.subr.mxu0 0.0
      %239 = vmatpush1.msra.mxu0 0.0
      %240 = vmatprep.subr.mxu0 0.0
      %241 = vmatpush1.msra.mxu0 0.0
      %242 = vmatprep.subr.mxu0 0.0
      %243 = vmatpush1.msra.mxu0 0.0
      %244 = vmatprep.subr.mxu0 0.0
      %245 = vmatpush1.msra.mxu0 0.0
      %246 = vmatprep.subr.mxu0 0.0
      %247 = vmatpush1.msra.mxu0 0.0
      %248 = vmatprep.subr.mxu0 0.0
      %249 = vmatpush1.msra.mxu0 0.0
      %250 = vmatprep.subr.mxu0 0.0
      %251 = vmatpush1.msra.mxu0 0.0
      %252 = vmatprep.subr.mxu0 0.0
      %253 = vmatpush1.msra.mxu0 0.0
      %254 = vmatprep.subr.mxu0 0.0
      %255 = vmatpush1.msra.mxu0 0.0
      %256 = vmatprep.subr.mxu0 0.0
      %257 = vmatpush1.msra.mxu0 0.0
      %258 = vmatprep.subr.mxu0 0.0
      %259 = vmatpush1.msra.mxu0 0.0
      %260 = vmatprep.subr.mxu0 0.0
      %261 = vmatpush1.msra.mxu0 0.0
      %262 = vmatprep.subr.mxu0 0.0
      %263 = vmatpush1.msra.mxu0 0.0
      %264 = vmatprep.subr.mxu0 0.0
      %265 = vmatpush1.msra.mxu0 0.0
      %266 = vmatprep.subr.mxu0 0.0
      %267 = vmatpush1.msra.mxu0 0.0
      %268 = vmatprep.subr.mxu0 0.0
      %269 = vmatpush1.msra.mxu0 0.0
      %270 = vmatprep.subr.mxu0 0.0
      %271 = vmatpush1.msra.mxu0 0.0
      %272 = vmatprep.subr.mxu0 0.0
      %273 = vmatpush1.msra.mxu0 0.0
      %274 = vmatprep.subr.mxu0 0.0
      %275 = vmatpush1.msra.mxu0 0.0
      %276 = vmatprep.subr.mxu0 0.0
      %277 = vmatpush1.msra.mxu0 0.0
      %278 = vmatprep.subr.mxu0 0.0
      %279 = vmatpush1.msra.mxu0 0.0
      %280 = vmatprep.mubr.f32.mxu0 0.0
      %281 = vmatmul.mubr.f32.gmra.mrb[0].mxu0 %v211
      %v282 = vpop.f32.mrb[0].mxu0
      %v283 = vadd.f32 %v202, %v282
      %v284 = vpop.f32.mrb[0].mxu0
      %285 = vmatprep.mubr.f32.mxu0 0.0
      %286 = vmatmul.mubr.f32.gmra.mrb[0].mxu0 %v214
      %v287 = vpop.f32.mrb[0].mxu0
      %v288 = vadd.f32 %v207, %v287
      %v289 = vpop.f32.mrb[0].mxu0
      %290 = vdwg.mxu0
      %291 = vmatprep.subr.mxu0 0.0
      %292 = vmatpush1.msra.mxu0 %v185
      %293 = vmatprep.subr.mxu0 0.0
      %294 = vmatpush1.msra.mxu0 %v186
      %295 = vmatprep.subr.mxu0 0.0
      %296 = vmatpush1.msra.mxu0 %v187
      %297 = vmatprep.subr.mxu0 0.0
      %298 = vmatpush1.msra.mxu0 %v188
      %299 = vmatprep.subr.mxu0 0.0
      %300 = vmatpush1.msra.mxu0 0.0
      %301 = vmatprep.subr.mxu0 0.0
      %302 = vmatpush1.msra.mxu0 0.0
      %303 = vmatprep.subr.mxu0 0.0
      %304 = vmatpush1.msra.mxu0 0.0
      %305 = vmatprep.subr.mxu0 0.0
      %306 = vmatpush1.msra.mxu0 0.0
      %307 = vmatprep.subr.mxu0 0.0
      %308 = vmatpush1.msra.mxu0 0.0
      %309 = vmatprep.subr.mxu0 0.0
      %310 = vmatpush1.msra.mxu0 0.0
      %311 = vmatprep.subr.mxu0 0.0
      %312 = vmatpush1.msra.mxu0 0.0
      %313 = vmatprep.subr.mxu0 0.0
      %314 = vmatpush1.msra.mxu0 0.0
      %315 = vmatprep.subr.mxu0 0.0
      %316 = vmatpush1.msra.mxu0 0.0
      %317 = vmatprep.subr.mxu0 0.0
      %318 = vmatpush1.msra.mxu0 0.0
      %319 = vmatprep.subr.mxu0 0.0
      %320 = vmatpush1.msra.mxu0 0.0
      %321 = vmatprep.subr.mxu0 0.0
      %322 = vmatpush1.msra.mxu0 0.0
      %323 = vmatprep.subr.mxu0 0.0
      %324 = vmatpush1.msra.mxu0 0.0
      %325 = vmatprep.subr.mxu0 0.0
      %326 = vmatpush1.msra.mxu0 0.0
      %327 = vmatprep.subr.mxu0 0.0
      %328 = vmatpush1.msra.mxu0 0.0
      %329 = vmatprep.subr.mxu0 0.0
      %330 = vmatpush1.msra.mxu0 0.0
      %331 = vmatprep.subr.mxu0 0.0
      %332 = vmatpush1.msra.mxu0 0.0
      %333 = vmatprep.subr.mxu0 0.0
      %334 = vmatpush1.msra.mxu0 0.0
      %335 = vmatprep.subr.mxu0 0.0
      %336 = vmatpush1.msra.mxu0 0.0
      %337 = vmatprep.subr.mxu0 0.0
      %338 = vmatpush1.msra.mxu0 0.0
      %339 = vmatprep.subr.mxu0 0.0
      %340 = vmatpush1.msra.mxu0 0.0
      %341 = vmatprep.subr.mxu0 0.0
      %342 = vmatpush1.msra.mxu0 0.0
      %343 = vmatprep.subr.mxu0 0.0
      %344 = vmatpush1.msra.mxu0 0.0
      %345 = vmatprep.subr.mxu0 0.0
      %346 = vmatpush1.msra.mxu0 0.0
      %347 = vmatprep.subr.mxu0 0.0
      %348 = vmatpush1.msra.mxu0 0.0
      %349 = vmatprep.subr.mxu0 0.0
      %350 = vmatpush1.msra.mxu0 0.0
      %351 = vmatprep.subr.mxu0 0.0
      %352 = vmatpush1.msra.mxu0 0.0
      %353 = vmatprep.subr.mxu0 0.0
      %354 = vmatpush1.msra.mxu0 0.0
      %355 = vmatprep.mubr.f32.mxu0 0.0
      %356 = vmatmul.mubr.f32.gmra.mrb[0].mxu0 %v211
      %v357 = vpop.f32.mrb[0].mxu0
      %v358 = vadd.f32 %v202, %v357
      %v359 = vpop.f32.mrb[0].mxu0
      %360 = vmatprep.mubr.f32.mxu0 0.0
      %361 = vmatmul.mubr.f32.gmra.mrb[0].mxu0 %v214
      %v362 = vpop.f32.mrb[0].mxu0
      %v363 = vadd.f32 %v207, %v362
      %v364 = vpop.f32.mrb[0].mxu0
      %365 = vdwg.mxu0
      %366 = vmatprep.subr.mxu0 0.0
      %367 = vmatpush1.msra.mxu0 %v189
      %368 = vmatprep.subr.mxu0 0.0
      %369 = vmatpush1.msra.mxu0 %v190
      %370 = vmatprep.subr.mxu0 0.0
      %371 = vmatpush1.msra.mxu0 %v191
      %372 = vmatprep.subr.mxu0 0.0
      %373 = vmatpush1.msra.mxu0 %v192
      %374 = vmatprep.subr.mxu0 0.0
      %375 = vmatpush1.msra.mxu0 0.0
      %376 = vmatprep.subr.mxu0 0.0
      %377 = vmatpush1.msra.mxu0 0.0
      %378 = vmatprep.subr.mxu0 0.0
      %379 = vmatpush1.msra.mxu0 0.0
      %380 = vmatprep.subr.mxu0 0.0
      %381 = vmatpush1.msra.mxu0 0.0
      %382 = vmatprep.subr.mxu0 0.0
      %383 = vmatpush1.msra.mxu0 0.0
      %384 = vmatprep.subr.mxu0 0.0
      %385 = vmatpush1.msra.mxu0 0.0
      %386 = vmatprep.subr.mxu0 0.0
      %387 = vmatpush1.msra.mxu0 0.0
      %388 = vmatprep.subr.mxu0 0.0
      %389 = vmatpush1.msra.mxu0 0.0
      %390 = vmatprep.subr.mxu0 0.0
      %391 = vmatpush1.msra.mxu0 0.0
      %392 = vmatprep.subr.mxu0 0.0
      %393 = vmatpush1.msra.mxu0 0.0
      %394 = vmatprep.subr.mxu0 0.0
      %395 = vmatpush1.msra.mxu0 0.0
      %396 = vmatprep.subr.mxu0 0.0
      %397 = vmatpush1.msra.mxu0 0.0
      %398 = vmatprep.subr.mxu0 0.0
      %399 = vmatpush1.msra.mxu0 0.0
      %400 = vmatprep.subr.mxu0 0.0
      %401 = vmatpush1.msra.mxu0 0.0
      %402 = vmatprep.subr.mxu0 0.0
      %403 = vmatpush1.msra.mxu0 0.0
      %404 = vmatprep.subr.mxu0 0.0
      %405 = vmatpush1.msra.mxu0 0.0
      %406 = vmatprep.subr.mxu0 0.0
      %407 = vmatpush1.msra.mxu0 0.0
      %408 = vmatprep.subr.mxu0 0.0
      %409 = vmatpush1.msra.mxu0 0.0
      %410 = vmatprep.subr.mxu0 0.0
      %411 = vmatpush1.msra.mxu0 0.0
      %412 = vmatprep.subr.mxu0 0.0
      %413 = vmatpush1.msra.mxu0 0.0
      %414 = vmatprep.subr.mxu0 0.0
      %415 = vmatpush1.msra.mxu0 0.0
      %416 = vmatprep.subr.mxu0 0.0
      %417 = vmatpush1.msra.mxu0 0.0
      %418 = vmatprep.subr.mxu0 0.0
      %419 = vmatpush1.msra.mxu0 0.0
      %420 = vmatprep.subr.mxu0 0.0
      %421 = vmatpush1.msra.mxu0 0.0
      %422 = vmatprep.subr.mxu0 0.0
      %423 = vmatpush1.msra.mxu0 0.0
      %424 = vmatprep.subr.mxu0 0.0
      %425 = vmatpush1.msra.mxu0 0.0
      %426 = vmatprep.subr.mxu0 0.0
      %427 = vmatpush1.msra.mxu0 0.0
      %428 = vmatprep.subr.mxu0 0.0
      %429 = vmatpush1.msra.mxu0 0.0
      %430 = vmatprep.mubr.f32.mxu0 0.0
      %431 = vmatmul.mubr.f32.gmra.mrb[0].mxu0 %v211
      %v432 = vpop.f32.mrb[0].mxu0
      %v433 = vadd.f32 %v202, %v432
      %v434 = vpop.f32.mrb[0].mxu0
      %435 = vmatprep.mubr.f32.mxu0 0.0
      %436 = vmatmul.mubr.f32.gmra.mrb[0].mxu0 %v214
      %v437 = vpop.f32.mrb[0].mxu0
      %v438 = vadd.f32 %v207, %v437
      %v439 = vpop.f32.mrb[0].mxu0
      %440 = vdwg.mxu0
      %441 = vmatprep.subr.mxu0 0.0
      %442 = vmatpush1.msra.mxu0 %v193
      %443 = vmatprep.subr.mxu0 0.0
      %444 = vmatpush1.msra.mxu0 %v194
      %445 = vmatprep.subr.mxu0 0.0
      %446 = vmatpush1.msra.mxu0 %v195
      %447 = vmatprep.subr.mxu0 0.0
      %448 = vmatpush1.msra.mxu0 %v196
      %449 = vmatprep.subr.mxu0 0.0
      %450 = vmatpush1.msra.mxu0 0.0
      %451 = vmatprep.subr.mxu0 0.0
      %452 = vmatpush1.msra.mxu0 0.0
      %453 = vmatprep.subr.mxu0 0.0
      %454 = vmatpush1.msra.mxu0 0.0
      %455 = vmatprep.subr.mxu0 0.0
      %456 = vmatpush1.msra.mxu0 0.0
      %457 = vmatprep.subr.mxu0 0.0
      %458 = vmatpush1.msra.mxu0 0.0
      %459 = vmatprep.subr.mxu0 0.0
      %460 = vmatpush1.msra.mxu0 0.0
      %461 = vmatprep.subr.mxu0 0.0
      %462 = vmatpush1.msra.mxu0 0.0
      %463 = vmatprep.subr.mxu0 0.0
      %464 = vmatpush1.msra.mxu0 0.0
      %465 = vmatprep.subr.mxu0 0.0
      %466 = vmatpush1.msra.mxu0 0.0
      %467 = vmatprep.subr.mxu0 0.0
      %468 = vmatpush1.msra.mxu0 0.0
      %469 = vmatprep.subr.mxu0 0.0
      %470 = vmatpush1.msra.mxu0 0.0
      %471 = vmatprep.subr.mxu0 0.0
      %472 = vmatpush1.msra.mxu0 0.0
      %473 = vmatprep.subr.mxu0 0.0
      %474 = vmatpush1.msra.mxu0 0.0
      %475 = vmatprep.subr.mxu0 0.0
      %476 = vmatpush1.msra.mxu0 0.0
      %477 = vmatprep.subr.mxu0 0.0
      %478 = vmatpush1.msra.mxu0 0.0
      %479 = vmatprep.subr.mxu0 0.0
      %480 = vmatpush1.msra.mxu0 0.0
      %481 = vmatprep.subr.mxu0 0.0
      %482 = vmatpush1.msra.mxu0 0.0
      %483 = vmatprep.subr.mxu0 0.0
      %484 = vmatpush1.msra.mxu0 0.0
      %485 = vmatprep.subr.mxu0 0.0
      %486 = vmatpush1.msra.mxu0 0.0
      %487 = vmatprep.subr.mxu0 0.0
      %488 = vmatpush1.msra.mxu0 0.0
      %489 = vmatprep.subr.mxu0 0.0
      %490 = vmatpush1.msra.mxu0 0.0
      %491 = vmatprep.subr.mxu0 0.0
      %492 = vmatpush1.msra.mxu0 0.0
      %493 = vmatprep.subr.mxu0 0.0
      %494 = vmatpush1.msra.mxu0 0.0
      %495 = vmatprep.subr.mxu0 0.0
      %496 = vmatpush1.msra.mxu0 0.0
      %497 = vmatprep.subr.mxu0 0.0
      %498 = vmatpush1.msra.mxu0 0.0
      %499 = vmatprep.subr.mxu0 0.0
      %500 = vmatpush1.msra.mxu0 0.0
      %501 = vmatprep.subr.mxu0 0.0
      %502 = vmatpush1.msra.mxu0 0.0
      %503 = vmatprep.subr.mxu0 0.0
      %504 = vmatpush1.msra.mxu0 0.0
      %505 = vmatprep.mubr.f32.mxu0 0.0
      %506 = vmatmul.mubr.f32.gmra.mrb[0].mxu0 %v211
      %v507 = vpop.f32.mrb[0].mxu0
      %v508 = vadd.f32 %v202, %v507
      %v509 = vpop.f32.mrb[0].mxu0
      %510 = vmatprep.mubr.f32.mxu0 0.0
      %511 = vmatmul.mubr.f32.gmra.mrb[0].mxu0 %v214
      %v512 = vpop.f32.mrb[0].mxu0
      %v513 = vadd.f32 %v207, %v512
      %v514 = vpop.f32.mrb[0].mxu0
      %515 = vdwg.mxu0
      %vm516 = vcmask 64512
      %517 = vst.msk [vmem:[%s177] sm:$0xff] %vm516, %v283
      %518 = vst.msk [vmem:[%s177 + $0x8] sm:$0xff] %vm516, %v288
      %519 = vst.msk [vmem:[%s177 + $0x10] sm:$0xff] %vm516, %v358
      %520 = vst.msk [vmem:[%s177 + $0x18] sm:$0xff] %vm516, %v363
      %521 = vst.msk [vmem:[%s177 + $0x20] sm:$0xff] %vm516, %v433
      %522 = vst.msk [vmem:[%s177 + $0x28] sm:$0xff] %vm516, %v438
      %523 = vst.msk [vmem:[%s177 + $0x30] sm:$0xff] %vm516, %v508
      %524 = vst.msk [vmem:[%s177 + $0x38] sm:$0xff] %vm516, %v513
      %s525 = smul.u32 4, %s14
      %p526 = scmp.lt.s32.totalorder %s525, 7
      %s527 = scalar_select %p526, %s525, 7
      %s528 = smul.addr %s527, 2
      %s529 = smul.addr %s528, 8
      %s530 = scalar_lea.vmem %s3, %s529
      // Predicated region
      $region33: #{tpu_custom_call.1} parent=31 // pred_check
        %p531 = pneg %p100
      $region34: #{tpu_custom_call.1} parent=31 // pred_check_branch
        %533 = sbr.rel (%p531) target = $region36
      $region35: #{tpu_custom_call.1} parent=31 // pred_region
        %s534 = smul.u32 4, %s14
      $region36: #{tpu_custom_call.1} parent=31 // pred_fallthru
        _
    $region32: #{tpu_custom_call.1} parent=5 // pred_fallthru
      _
    %p535 = scmp.le.s32.totalorder 2, %s9
    // Predicated region
    $region37: #{tpu_custom_call.1} parent=5 // pred_check
      %p536 = pneg %p535
    $region38: #{tpu_custom_call.1} parent=5 // pred_check_branch
      %538 = sbr.rel (%p536) target = $region40
    $region39: #{tpu_custom_call.1} parent=5 // pred_region
      %s539 = ssub.s32 %s9, 2
      // Predicated region
      $region41: #{tpu_custom_call.1} parent=39 // pred_check
        %p540 = pneg %p106
      $region42: #{tpu_custom_call.1} parent=39 // pred_check_branch
        %542 = sbr.rel (%p540) target = $region44
      $region43: #{tpu_custom_call.1} parent=39 // pred_region
        %s543 = smul.u32 4, %s15
        %p544 = scmp.lt.s32.totalorder %s543, 7
        %s545 = scalar_select %p544, %s543, 7
        %s546 = smul.addr %s545, 2
        %s547 = smul.addr %s546, 8
        %s548 = scalar_lea.vmem %s3, %s547
      $region44: #{tpu_custom_call.1} parent=39 // pred_fallthru
        _
    $region40: #{tpu_custom_call.1} parent=5 // pred_fallthru
      _
  $region6: #{tpu_custom_call.1} parent=0 // loop_footer
    %s13 = sadd.s32 1, %s9
  $region7: #{tpu_custom_call.1} parent=0 // loop_footer_branch
    %8 = sbr.rel target = $region3
  $region8: #{tpu_custom_call.1} parent=0 // loop_exit
    _

</llo_original>
